<compile_context>
chip_gen: v7x
topology: tpu7x:2x2x1
jax: 0.10.0
libtpu: 0.0.40
codegen_flags: <defaults>
</compile_context>

<pallas_src>
import math

import jax
import jax.numpy as jnp
from jax.experimental import pallas as pl
from jax.experimental.pallas import tpu as pltpu


def _round_up(x, m):
    return (x + m - 1) // m * m


def actor_kernel(x_ref, w1_ref, b1_ref, w2_ref, b2_ref, wh_ref, bh_ref,
                 mask_ref, out_ref):
    # bf16 operands for the MXU, f32 accumulation; activations stay f32.
    x = x_ref[...].astype(jnp.bfloat16)

    # fc layer 1 + ReLU:  [TB, D_in] @ [D_in, D_h]
    h1 = jnp.dot(x, w1_ref[...], preferred_element_type=jnp.float32) + b1_ref[...]
    h1 = jnp.maximum(h1, 0.0)

    # fc layer 2 + ReLU:  [TB, D_h] @ [D_h, D_h]
    h2 = jnp.dot(h1.astype(jnp.bfloat16), w2_ref[...],
                 preferred_element_type=jnp.float32) + b2_ref[...]
    h2 = jnp.maximum(h2, 0.0)

    # Fused heads: one wide matmul -> [TB, P]
    #   columns [0, A) = mean, [A, 2A) = log_std, rest = zero padding.
    heads = jnp.dot(h2.astype(jnp.bfloat16), wh_ref[...],
                    preferred_element_type=jnp.float32) + bh_ref[...]

    # Whole-slab clamp + exp (EUP slot is otherwise idle); lane select via the
    # precomputed [1, P] std-column mask.  Keep the clip BEFORE the exp.
    std_all = jnp.exp(jnp.clip(heads, -20.0, 2.0))
    out_ref[...] = jnp.where(mask_ref[...] != 0.0, std_all, heads).astype(out_ref.dtype)


def _choose_tile_batch(B, max_block):
    """Multiple-of-16 batch tile that minimises padding, capped at max_block."""
    max_block = _round_up(max_block, 16)
    n_blocks = max(1, math.ceil(B / max_block))
    return min(_round_up(math.ceil(B / n_blocks), 16), max_block)


def actor_forward(state, params, action_dim, *, max_block_batch=128,
                  out_dtype=jnp.float32):
    """state: [B, input_dim] float32 -> (mean [B, A], std [B, A]).

    max_block_batch=128 keeps >=2 grid blocks for large B (v7x megacore) and
    bounds live f32 intermediates; use 256 on v5e/v6e for very large batches.
    out_dtype=jnp.bfloat16 halves the packed-slab writeback if tolerable.
    """
    w1, b1, w2, b2, wh, bh, std_mask = params
    B, in_dim = state.shape
    D_in = w1.shape[0]                 # lane-padded input_dim (multiple of 128)
    P = wh.shape[1]                    # lane-padded 2*action_dim

    TB = _choose_tile_batch(B, max_block_batch)
    B_pad = _round_up(B, TB)
    pad_b, pad_f = B_pad - B, D_in - in_dim
    if pad_b or pad_f:
        state = jnp.pad(state, ((0, pad_b), (0, pad_f)))

    def build(resident_mode):
        def resident(arr):
            # Whole-array block, VMEM-resident across all grid steps.
            if resident_mode is None:
                return pl.BlockSpec(arr.shape, lambda i: (0, 0))
            return pl.BlockSpec(arr.shape, lambda i: (0, 0),
                                pipeline_mode=resident_mode)

        return pl.pallas_call(
            actor_kernel,
            out_shape=jax.ShapeDtypeStruct((B_pad, P), out_dtype),
            grid=(B_pad // TB,),
            in_specs=[
                pl.BlockSpec((TB, D_in), lambda i: (i, 0)),     # state tile
                resident(w1), resident(b1),
                resident(w2), resident(b2),
                resident(wh), resident(bh),
                resident(std_mask),
            ],
            out_specs=pl.BlockSpec((TB, P), lambda i: (i, 0)),  # lane-dense slab
            compiler_params=pltpu.CompilerParams(
                dimension_semantics=("parallel",)),
        )

    args = (state, w1, b1, w2, b2, wh, bh, std_mask)
    try:
        # Constant-index weights are never re-DMA'd; single-buffer them so the
        # default double-buffer doesn't double their VMEM footprint.
        packed = build(pl.Buffered(1))(*args)
    except Exception:
        # pipeline_mode / Buffered(1) not supported by this JAX build: fall
        # back to default (double-buffered) residents — correctness identical.
        packed = build(None)(*args)

    mean = packed[:B, :action_dim].astype(jnp.float32)
    std = packed[:B, action_dim:2 * action_dim].astype(jnp.float32)
    return mean, std


def init_actor_params(key, input_dim, hidden_dim, action_dim):
    """Deterministic synthetic parameters (uniform, nn.Linear-like scale).

    Weights stored bf16 (MXU operand dtype), biases f32 (added after the f32
    accumulation).  All feature dims are zero-padded to 128 lanes so every
    operand and intermediate in the kernel is lane-dense:
      w1: [D_in, D_h]   w2: [D_h, D_h]   wh: [D_h, P]   (P = pad(2*A, 128))
    wh packs both heads: mean cols [0, A), log_std cols [A, 2A), rest zero.
    """
    keys = jax.random.split(key, 8)

    def linear(kw, kb, fan_in, fan_out):
        bound = 1.0 / math.sqrt(fan_in)
        w = jax.random.uniform(kw, (fan_in, fan_out), jnp.float32, -bound, bound)
        b = jax.random.uniform(kb, (1, fan_out), jnp.float32, -bound, bound)
        return w, b

    w1, b1 = linear(keys[0], keys[1], input_dim, hidden_dim)
    w2, b2 = linear(keys[2], keys[3], hidden_dim, hidden_dim)
    wm, bm = linear(keys[4], keys[5], hidden_dim, action_dim)
    ws, bs = linear(keys[6], keys[7], hidden_dim, action_dim)

    D_in = _round_up(input_dim, 128)
    D_h = _round_up(hidden_dim, 128)
    P = _round_up(2 * action_dim, 128)

    w1p = jnp.zeros((D_in, D_h), jnp.float32).at[:input_dim, :hidden_dim].set(w1)
    b1p = jnp.zeros((1, D_h), jnp.float32).at[:, :hidden_dim].set(b1)
    w2p = jnp.zeros((D_h, D_h), jnp.float32).at[:hidden_dim, :hidden_dim].set(w2)
    b2p = jnp.zeros((1, D_h), jnp.float32).at[:, :hidden_dim].set(b2)
    whp = (jnp.zeros((D_h, P), jnp.float32)
           .at[:hidden_dim, :action_dim].set(wm)
           .at[:hidden_dim, action_dim:2 * action_dim].set(ws))
    bhp = (jnp.zeros((1, P), jnp.float32)
           .at[:, :action_dim].set(bm)
           .at[:, action_dim:2 * action_dim].set(bs))

    # Precomputed std-column select mask (1.0 on log_std lanes), resident input.
    col = jnp.arange(P)
    std_mask = ((col >= action_dim) & (col < 2 * action_dim)
                ).astype(jnp.float32)[None, :]

    bf16 = jnp.bfloat16
    return (w1p.astype(bf16), b1p, w2p.astype(bf16), b2p, whp.astype(bf16), bhp,
            std_mask)


def _ref_forward(state, params, action_dim):
    """Pure-JAX reference with the same padding / bf16-operand math."""
    w1, b1, w2, b2, wh, bh, _ = params
    D_in = w1.shape[0]
    state = jnp.pad(state, ((0, 0), (0, D_in - state.shape[1])))

    def mm(a, w):
        return jnp.dot(a.astype(jnp.bfloat16), w,
                       preferred_element_type=jnp.float32)

    h = jnp.maximum(mm(state, w1) + b1, 0.0)
    h = jnp.maximum(mm(h, w2) + b2, 0.0)
    heads = mm(h, wh) + bh
    mean = heads[:, :action_dim]
    log_std = jnp.clip(heads[:, action_dim:2 * action_dim], -20.0, 2.0)
    return mean, jnp.exp(log_std)


# TODO(synk): select_action (Normal sampling, tanh squash, log_prob) is
# host-side inference logic, not part of the module's forward(); left out.

if __name__ == "__main__":
    batch, input_dim, hidden_dim, action_dim = 8, 32, 64, 16

    key = jax.random.PRNGKey(0)
    k_state, k_params = jax.random.split(key)

    state = jax.random.normal(k_state, (batch, input_dim), jnp.float32)
    params = init_actor_params(k_params, input_dim, hidden_dim, action_dim)

    mean, std = actor_forward(state, params, action_dim)
    jax.block_until_ready((mean, std))

    ref_mean, ref_std = _ref_forward(state, params, action_dim)
    assert mean.shape == (batch, action_dim) and std.shape == (batch, action_dim)
    assert jnp.allclose(mean, ref_mean, atol=1e-3, rtol=1e-3)
    assert jnp.allclose(std, ref_std, atol=1e-3, rtol=1e-3)

    print("KERNEL_OK")
</pallas_src>

<mosaic_0001>
module attributes {stable_mosaic.version = 11 : i64} {
  func.func @actor_kernel(%arg0: i32, %arg1: memref<16x128xf32, #tpu.memory_space<vmem>>, %arg2: memref<128x128xbf16, #tpu.memory_space<vmem>>, %arg3: memref<1x128xf32, #tpu.memory_space<vmem>>, %arg4: memref<128x128xbf16, #tpu.memory_space<vmem>>, %arg5: memref<1x128xf32, #tpu.memory_space<vmem>>, %arg6: memref<128x128xbf16, #tpu.memory_space<vmem>>, %arg7: memref<1x128xf32, #tpu.memory_space<vmem>>, %arg8: memref<1x128xf32, #tpu.memory_space<vmem>>, %arg9: memref<16x128xf32, #tpu.memory_space<vmem>>) attributes {dimension_semantics = [#tpu.dimension_semantics<parallel>], iteration_bounds = array<i64: 1>, scalar_prefetch = 0 : i64, scratch_operands = 0 : i64, tpu.core_type = #tpu.core_type<tc>, window_params = [{transform_indices = @transform_0, window_bounds = array<i64: 16, 128>}, {pipeline_mode = #tpu.pipeline_mode<synchronous>, transform_indices = @transform_1, window_bounds = array<i64: 128, 128>}, {pipeline_mode = #tpu.pipeline_mode<synchronous>, transform_indices = @transform_2, window_bounds = array<i64: 1, 128>}, {pipeline_mode = #tpu.pipeline_mode<synchronous>, transform_indices = @transform_3, window_bounds = array<i64: 128, 128>}, {pipeline_mode = #tpu.pipeline_mode<synchronous>, transform_indices = @transform_4, window_bounds = array<i64: 1, 128>}, {pipeline_mode = #tpu.pipeline_mode<synchronous>, transform_indices = @transform_5, window_bounds = array<i64: 128, 128>}, {pipeline_mode = #tpu.pipeline_mode<synchronous>, transform_indices = @transform_6, window_bounds = array<i64: 1, 128>}, {pipeline_mode = #tpu.pipeline_mode<synchronous>, transform_indices = @transform_7, window_bounds = array<i64: 1, 128>}, {transform_indices = @transform_8, window_bounds = array<i64: 16, 128>}]} {
    %c0 = arith.constant 0 : index
    %c0_0 = arith.constant 0 : index
    %0 = vector.load %arg1[%c0, %c0_0] : memref<16x128xf32, #tpu.memory_space<vmem>>, vector<16x128xf32>
    %1 = arith.truncf %0 : vector<16x128xf32> to vector<16x128xbf16>
    %c0_1 = arith.constant 0 : index
    %c0_2 = arith.constant 0 : index
    %2 = vector.load %arg2[%c0_1, %c0_2] : memref<128x128xbf16, #tpu.memory_space<vmem>>, vector<128x128xbf16>
    %cst = arith.constant dense<0.000000e+00> : vector<16x128xf32>
    %3 = tpu.matmul %1, %2, %cst {dimension_numbers = #tpu.dot_dimension_numbers<[1], [0], [0], [1], [0, 0, 1, 1], [], []>} : vector<16x128xbf16>, vector<128x128xbf16>, vector<16x128xf32> -> vector<16x128xf32>
    %c0_3 = arith.constant 0 : index
    %c0_4 = arith.constant 0 : index
    %4 = vector.load %arg3[%c0_3, %c0_4] : memref<1x128xf32, #tpu.memory_space<vmem>>, vector<1x128xf32>
    %5 = vector.broadcast %4 : vector<1x128xf32> to vector<16x128xf32>
    %6 = arith.addf %3, %5 : vector<16x128xf32>
    %cst_5 = arith.constant 0.000000e+00 : f32
    %7 = vector.broadcast %cst_5 : f32 to vector<16x128xf32>
    %8 = arith.maximumf %6, %7 : vector<16x128xf32>
    %9 = arith.truncf %8 : vector<16x128xf32> to vector<16x128xbf16>
    %c0_6 = arith.constant 0 : index
    %c0_7 = arith.constant 0 : index
    %10 = vector.load %arg4[%c0_6, %c0_7] : memref<128x128xbf16, #tpu.memory_space<vmem>>, vector<128x128xbf16>
    %cst_8 = arith.constant dense<0.000000e+00> : vector<16x128xf32>
    %11 = tpu.matmul %9, %10, %cst_8 {dimension_numbers = #tpu.dot_dimension_numbers<[1], [0], [0], [1], [0, 0, 1, 1], [], []>} : vector<16x128xbf16>, vector<128x128xbf16>, vector<16x128xf32> -> vector<16x128xf32>
    %c0_9 = arith.constant 0 : index
    %c0_10 = arith.constant 0 : index
    %12 = vector.load %arg5[%c0_9, %c0_10] : memref<1x128xf32, #tpu.memory_space<vmem>>, vector<1x128xf32>
    %13 = vector.broadcast %12 : vector<1x128xf32> to vector<16x128xf32>
    %14 = arith.addf %11, %13 : vector<16x128xf32>
    %cst_11 = arith.constant 0.000000e+00 : f32
    %15 = vector.broadcast %cst_11 : f32 to vector<16x128xf32>
    %16 = arith.maximumf %14, %15 : vector<16x128xf32>
    %17 = arith.truncf %16 : vector<16x128xf32> to vector<16x128xbf16>
    %c0_12 = arith.constant 0 : index
    %c0_13 = arith.constant 0 : index
    %18 = vector.load %arg6[%c0_12, %c0_13] : memref<128x128xbf16, #tpu.memory_space<vmem>>, vector<128x128xbf16>
    %cst_14 = arith.constant dense<0.000000e+00> : vector<16x128xf32>
    %19 = tpu.matmul %17, %18, %cst_14 {dimension_numbers = #tpu.dot_dimension_numbers<[1], [0], [0], [1], [0, 0, 1, 1], [], []>} : vector<16x128xbf16>, vector<128x128xbf16>, vector<16x128xf32> -> vector<16x128xf32>
    %c0_15 = arith.constant 0 : index
    %c0_16 = arith.constant 0 : index
    %20 = vector.load %arg7[%c0_15, %c0_16] : memref<1x128xf32, #tpu.memory_space<vmem>>, vector<1x128xf32>
    %21 = vector.broadcast %20 : vector<1x128xf32> to vector<16x128xf32>
    %22 = arith.addf %19, %21 : vector<16x128xf32>
    %cst_17 = arith.constant -2.000000e+01 : f32
    %cst_18 = arith.constant 2.000000e+00 : f32
    %23 = vector.broadcast %cst_17 : f32 to vector<16x128xf32>
    %24 = arith.maximumf %23, %22 : vector<16x128xf32>
    %25 = vector.broadcast %cst_18 : f32 to vector<16x128xf32>
    %26 = arith.minimumf %25, %24 : vector<16x128xf32>
    %27 = math.exp %26 : vector<16x128xf32>
    %c0_19 = arith.constant 0 : index
    %c0_20 = arith.constant 0 : index
    %28 = vector.load %arg8[%c0_19, %c0_20] : memref<1x128xf32, #tpu.memory_space<vmem>>, vector<1x128xf32>
    %cst_21 = arith.constant 0.000000e+00 : f32
    %29 = vector.broadcast %cst_21 : f32 to vector<1x128xf32>
    %30 = arith.cmpf one, %28, %29 : vector<1x128xf32>
    %31 = vector.shape_cast %30 : vector<1x128xi1> to vector<1x128xi1>
    %32 = vector.broadcast %31 : vector<1x128xi1> to vector<16x128xi1>
    %33 = arith.select %32, %27, %22 : vector<16x128xi1>, vector<16x128xf32>
    %c0_22 = arith.constant 0 : index
    %c0_23 = arith.constant 0 : index
    %34 = vector.load %arg9[%c0_22, %c0_23] : memref<16x128xf32, #tpu.memory_space<vmem>>, vector<16x128xf32>
    tpu.vector_store %arg9[%c0_22, %c0_23], %33 {strides = array<i32>} : memref<16x128xf32, #tpu.memory_space<vmem>>, vector<16x128xf32>,
    return
  }
  func.func @transform_0(%arg0: i32) -> (i32, i32) {
    %c0_i32 = arith.constant 0 : i32
    %c0_i32_0 = arith.constant 0 : i32
    return %arg0, %c0_i32 : i32, i32
  }
  func.func @transform_1(%arg0: i32) -> (i32, i32) {
    %c0_i32 = arith.constant 0 : i32
    %c0_i32_0 = arith.constant 0 : i32
    %c0_i32_1 = arith.constant 0 : i32
    return %c0_i32, %c0_i32_0 : i32, i32
  }
  func.func @transform_2(%arg0: i32) -> (i32, i32) {
    %c0_i32 = arith.constant 0 : i32
    %c0_i32_0 = arith.constant 0 : i32
    %c0_i32_1 = arith.constant 0 : i32
    return %c0_i32, %c0_i32_0 : i32, i32
  }
  func.func @transform_3(%arg0: i32) -> (i32, i32) {
    %c0_i32 = arith.constant 0 : i32
    %c0_i32_0 = arith.constant 0 : i32
    %c0_i32_1 = arith.constant 0 : i32
    return %c0_i32, %c0_i32_0 : i32, i32
  }
  func.func @transform_4(%arg0: i32) -> (i32, i32) {
    %c0_i32 = arith.constant 0 : i32
    %c0_i32_0 = arith.constant 0 : i32
    %c0_i32_1 = arith.constant 0 : i32
    return %c0_i32, %c0_i32_0 : i32, i32
  }
  func.func @transform_5(%arg0: i32) -> (i32, i32) {
    %c0_i32 = arith.constant 0 : i32
    %c0_i32_0 = arith.constant 0 : i32
    %c0_i32_1 = arith.constant 0 : i32
    return %c0_i32, %c0_i32_0 : i32, i32
  }
  func.func @transform_6(%arg0: i32) -> (i32, i32) {
    %c0_i32 = arith.constant 0 : i32
    %c0_i32_0 = arith.constant 0 : i32
    %c0_i32_1 = arith.constant 0 : i32
    return %c0_i32, %c0_i32_0 : i32, i32
  }
  func.func @transform_7(%arg0: i32) -> (i32, i32) {
    %c0_i32 = arith.constant 0 : i32
    %c0_i32_0 = arith.constant 0 : i32
    %c0_i32_1 = arith.constant 0 : i32
    return %c0_i32, %c0_i32_0 : i32, i32
  }
  func.func @transform_8(%arg0: i32) -> (i32, i32) {
    %c0_i32 = arith.constant 0 : i32
    %c0_i32_0 = arith.constant 0 : i32
    return %arg0, %c0_i32 : i32, i32
  }
}

module attributes {stable_mosaic.version = 11 : i64} {
  func.func @actor_kernel(%arg0: i32, %arg1: memref<16x128xf32, #tpu.memory_space<vmem>>, %arg2: memref<128x128xbf16, #tpu.memory_space<vmem>>, %arg3: memref<1x128xf32, #tpu.memory_space<vmem>>, %arg4: memref<128x128xbf16, #tpu.memory_space<vmem>>, %arg5: memref<1x128xf32, #tpu.memory_space<vmem>>, %arg6: memref<128x128xbf16, #tpu.memory_space<vmem>>, %arg7: memref<1x128xf32, #tpu.memory_space<vmem>>, %arg8: memref<1x128xf32, #tpu.memory_space<vmem>>, %arg9: memref<16x128xf32, #tpu.memory_space<vmem>>) attributes {dimension_semantics = [#tpu.dimension_semantics<parallel>], iteration_bounds = array<i64: 1>, scalar_prefetch = 0 : i64, scratch_operands = 0 : i64, tpu.core_type = #tpu.core_type<tc>, window_params = [{transform_indices = @transform_0, window_bounds = array<i64: 16, 128>}, {pipeline_mode = #tpu.pipeline_mode<synchronous>, transform_indices = @transform_1, window_bounds = array<i64: 128, 128>}, {pipeline_mode = #tpu.pipeline_mode<synchronous>, transform_indices = @transform_2, window_bounds = array<i64: 1, 128>}, {pipeline_mode = #tpu.pipeline_mode<synchronous>, transform_indices = @transform_3, window_bounds = array<i64: 128, 128>}, {pipeline_mode = #tpu.pipeline_mode<synchronous>, transform_indices = @transform_4, window_bounds = array<i64: 1, 128>}, {pipeline_mode = #tpu.pipeline_mode<synchronous>, transform_indices = @transform_5, window_bounds = array<i64: 128, 128>}, {pipeline_mode = #tpu.pipeline_mode<synchronous>, transform_indices = @transform_6, window_bounds = array<i64: 1, 128>}, {pipeline_mode = #tpu.pipeline_mode<synchronous>, transform_indices = @transform_7, window_bounds = array<i64: 1, 128>}, {transform_indices = @transform_8, window_bounds = array<i64: 16, 128>}]} {
    %c0 = arith.constant 0 : index
    %c0_0 = arith.constant 0 : index
    %0 = vector.load %arg1[%c0, %c0_0] : memref<16x128xf32, #tpu.memory_space<vmem>>, vector<16x128xf32>
    %1 = arith.truncf %0 : vector<16x128xf32> to vector<16x128xbf16>
    %c0_1 = arith.constant 0 : index
    %c0_2 = arith.constant 0 : index
    %2 = vector.load %arg2[%c0_1, %c0_2] : memref<128x128xbf16, #tpu.memory_space<vmem>>, vector<128x128xbf16>
    %cst = arith.constant dense<0.000000e+00> : vector<16x128xf32>
    %3 = tpu.matmul %1, %2, %cst {dimension_numbers = #tpu.dot_dimension_numbers<[1], [0], [0], [1], [0, 0, 1, 1], [], []>} : vector<16x128xbf16>, vector<128x128xbf16>, vector<16x128xf32> -> vector<16x128xf32>
    %c0_3 = arith.constant 0 : index
    %c0_4 = arith.constant 0 : index
    %4 = vector.load %arg3[%c0_3, %c0_4] : memref<1x128xf32, #tpu.memory_space<vmem>>, vector<1x128xf32>
    %5 = vector.broadcast %4 : vector<1x128xf32> to vector<16x128xf32>
    %6 = arith.addf %3, %5 : vector<16x128xf32>
    %cst_5 = arith.constant 0.000000e+00 : f32
    %7 = vector.broadcast %cst_5 : f32 to vector<16x128xf32>
    %8 = arith.maximumf %6, %7 : vector<16x128xf32>
    %9 = arith.truncf %8 : vector<16x128xf32> to vector<16x128xbf16>
    %c0_6 = arith.constant 0 : index
    %c0_7 = arith.constant 0 : index
    %10 = vector.load %arg4[%c0_6, %c0_7] : memref<128x128xbf16, #tpu.memory_space<vmem>>, vector<128x128xbf16>
    %cst_8 = arith.constant dense<0.000000e+00> : vector<16x128xf32>
    %11 = tpu.matmul %9, %10, %cst_8 {dimension_numbers = #tpu.dot_dimension_numbers<[1], [0], [0], [1], [0, 0, 1, 1], [], []>} : vector<16x128xbf16>, vector<128x128xbf16>, vector<16x128xf32> -> vector<16x128xf32>
    %c0_9 = arith.constant 0 : index
    %c0_10 = arith.constant 0 : index
    %12 = vector.load %arg5[%c0_9, %c0_10] : memref<1x128xf32, #tpu.memory_space<vmem>>, vector<1x128xf32>
    %13 = vector.broadcast %12 : vector<1x128xf32> to vector<16x128xf32>
    %14 = arith.addf %11, %13 : vector<16x128xf32>
    %cst_11 = arith.constant 0.000000e+00 : f32
    %15 = vector.broadcast %cst_11 : f32 to vector<16x128xf32>
    %16 = arith.maximumf %14, %15 : vector<16x128xf32>
    %17 = arith.truncf %16 : vector<16x128xf32> to vector<16x128xbf16>
    %c0_12 = arith.constant 0 : index
    %c0_13 = arith.constant 0 : index
    %18 = vector.load %arg6[%c0_12, %c0_13] : memref<128x128xbf16, #tpu.memory_space<vmem>>, vector<128x128xbf16>
    %cst_14 = arith.constant dense<0.000000e+00> : vector<16x128xf32>
    %19 = tpu.matmul %17, %18, %cst_14 {dimension_numbers = #tpu.dot_dimension_numbers<[1], [0], [0], [1], [0, 0, 1, 1], [], []>} : vector<16x128xbf16>, vector<128x128xbf16>, vector<16x128xf32> -> vector<16x128xf32>
    %c0_15 = arith.constant 0 : index
    %c0_16 = arith.constant 0 : index
    %20 = vector.load %arg7[%c0_15, %c0_16] : memref<1x128xf32, #tpu.memory_space<vmem>>, vector<1x128xf32>
    %21 = vector.broadcast %20 : vector<1x128xf32> to vector<16x128xf32>
    %22 = arith.addf %19, %21 : vector<16x128xf32>
    %cst_17 = arith.constant -2.000000e+01 : f32
    %cst_18 = arith.constant 2.000000e+00 : f32
    %23 = vector.broadcast %cst_17 : f32 to vector<16x128xf32>
    %24 = arith.maximumf %23, %22 : vector<16x128xf32>
    %25 = vector.broadcast %cst_18 : f32 to vector<16x128xf32>
    %26 = arith.minimumf %25, %24 : vector<16x128xf32>
    %27 = math.exp %26 : vector<16x128xf32>
    %c0_19 = arith.constant 0 : index
    %c0_20 = arith.constant 0 : index
    %28 = vector.load %arg8[%c0_19, %c0_20] : memref<1x128xf32, #tpu.memory_space<vmem>>, vector<1x128xf32>
    %cst_21 = arith.constant 0.000000e+00 : f32
    %29 = vector.broadcast %cst_21 : f32 to vector<1x128xf32>
    %30 = arith.cmpf one, %28, %29 : vector<1x128xf32>
    %31 = vector.shape_cast %30 : vector<1x128xi1> to vector<1x128xi1>
    %32 = vector.broadcast %31 : vector<1x128xi1> to vector<16x128xi1>
    %33 = arith.select %32, %27, %22 : vector<16x128xi1>, vector<16x128xf32>
    %c0_22 = arith.constant 0 : index
    %c0_23 = arith.constant 0 : index
    %34 = vector.load %arg9[%c0_22, %c0_23] : memref<16x128xf32, #tpu.memory_space<vmem>>, vector<16x128xf32>
    tpu.vector_store %arg9[%c0_22, %c0_23], %33 {strides = array<i32>} : memref<16x128xf32, #tpu.memory_space<vmem>>, vector<16x128xf32>,
    return
  }
  func.func @transform_0(%arg0: i32) -> (i32, i32) {
    %c0_i32 = arith.constant 0 : i32
    %c0_i32_0 = arith.constant 0 : i32
    return %arg0, %c0_i32 : i32, i32
  }
  func.func @transform_1(%arg0: i32) -> (i32, i32) {
    %c0_i32 = arith.constant 0 : i32
    %c0_i32_0 = arith.constant 0 : i32
    %c0_i32_1 = arith.constant 0 : i32
    return %c0_i32, %c0_i32_0 : i32, i32
  }
  func.func @transform_2(%arg0: i32) -> (i32, i32) {
    %c0_i32 = arith.constant 0 : i32
    %c0_i32_0 = arith.constant 0 : i32
    %c0_i32_1 = arith.constant 0 : i32
    return %c0_i32, %c0_i32_0 : i32, i32
  }
  func.func @transform_3(%arg0: i32) -> (i32, i32) {
    %c0_i32 = arith.constant 0 : i32
    %c0_i32_0 = arith.constant 0 : i32
    %c0_i32_1 = arith.constant 0 : i32
    return %c0_i32, %c0_i32_0 : i32, i32
  }
  func.func @transform_4(%arg0: i32) -> (i32, i32) {
    %c0_i32 = arith.constant 0 : i32
    %c0_i32_0 = arith.constant 0 : i32
    %c0_i32_1 = arith.constant 0 : i32
    return %c0_i32, %c0_i32_0 : i32, i32
  }
  func.func @transform_5(%arg0: i32) -> (i32, i32) {
    %c0_i32 = arith.constant 0 : i32
    %c0_i32_0 = arith.constant 0 : i32
    %c0_i32_1 = arith.constant 0 : i32
    return %c0_i32, %c0_i32_0 : i32, i32
  }
  func.func @transform_6(%arg0: i32) -> (i32, i32) {
    %c0_i32 = arith.constant 0 : i32
    %c0_i32_0 = arith.constant 0 : i32
    %c0_i32_1 = arith.constant 0 : i32
    return %c0_i32, %c0_i32_0 : i32, i32
  }
  func.func @transform_7(%arg0: i32) -> (i32, i32) {
    %c0_i32 = arith.constant 0 : i32
    %c0_i32_0 = arith.constant 0 : i32
    %c0_i32_1 = arith.constant 0 : i32
    return %c0_i32, %c0_i32_0 : i32, i32
  }
  func.func @transform_8(%arg0: i32) -> (i32, i32) {
    %c0_i32 = arith.constant 0 : i32
    %c0_i32_0 = arith.constant 0 : i32
    return %arg0, %c0_i32 : i32, i32
  }
}

</mosaic_0001>

<llo_original>
// kernel: tpu_custom_call.1
$region0: #{tpu_custom_call.1}
  #allocation0 [shape = 'u32[]', space=smem, size = 0x4, offset = 0x4, fixed_abs, tag = 'smem constant byte address 0x4 - core index']
  #allocation1 [shape = 'u32[144,128]{1,0:T(1,128)}', space=vmem, size = 0x12000, scoped, tag = 'internal scratch']
  %s0 = inlined_call_operand.hbm [shape: f32[16,128], index: 0, kind: input, shape index: {}]
  %s1 = inlined_call_operand.hbm [shape: bf16[128,128], index: 1, kind: input, shape index: {}]
  %s2 = inlined_call_operand.vmem [shape: f32[1,128], index: 2, kind: input, shape index: {}]
  %s3 = inlined_call_operand.hbm [shape: bf16[128,128], index: 3, kind: input, shape index: {}]
  %s4 = inlined_call_operand.vmem [shape: f32[1,128], index: 4, kind: input, shape index: {}]
  %s5 = inlined_call_operand.hbm [shape: bf16[128,128], index: 5, kind: input, shape index: {}]
  %s6 = inlined_call_operand.vmem [shape: f32[1,128], index: 6, kind: input, shape index: {}]
  %s7 = inlined_call_operand.vmem [shape: f32[1,128], index: 7, kind: input, shape index: {}]
  %s8 = inlined_call_operand.hbm [shape: f32[16,128], index: 8, kind: output, shape index: {}]
  %s9 = sld [smem:[#allocation0]]
  $region58: #{tpu_custom_call.1} parent=0
    _
  %s11 = ssub.s32 1, %s9
  %s12 = scalar_select 0, %s11, %s9
  $region1: #{tpu_custom_call.1} parent=0
    #allocation2 [shape = 'u8[8192]{0}', space=vmem, size = 0x2000, scoped, tag = 'input window, operand 0, single buffered']
    #allocation3 [shape = 's32[1]{0}', space=sflag, size = 0x4, scoped, tag = 'scoped memory for tpu_custom_call.1']
    #allocation4 [shape = 's32[1]{0}', space=sflag, size = 0x4, scoped, tag = 'scoped memory for tpu_custom_call.1']
    #allocation5 [shape = 'u8[32768]{0}', space=vmem, size = 0x8000, scoped, tag = 'input window, operand 1, single buffered']
    #allocation6 [shape = 's32[1]{0}', space=sflag, size = 0x4, scoped, tag = 'scoped memory for tpu_custom_call.1']
    #allocation7 [shape = 'u8[32768]{0}', space=vmem, size = 0x8000, scoped, tag = 'input window, operand 3, single buffered']
    #allocation8 [shape = 'u8[32768]{0}', space=vmem, size = 0x8000, scoped, tag = 'input window, operand 5, single buffered']
    #allocation9 [shape = 's32[1]{0}', space=sflag, size = 0x4, scoped, tag = 'scoped memory for tpu_custom_call.1']
    #allocation10 [shape = 'u8[8192]{0}', space=vmem, size = 0x2000, scoped, tag = 'output window, operand 0, single buffered']
    %13 = vsyncpa [#allocation3], 0
    %14 = vsyncpa [#allocation6], 0
    %15 = vsyncpa [#allocation9], 0
    %16 = vsyncpa [#allocation4], 0
    // Predicated region
    $region2: #{tpu_custom_call.1} parent=1 // pred_check
      _
    $region3: #{tpu_custom_call.1} parent=1 // pred_check_branch
      %18 = sbr.rel (0) target = $region5
    $region4: #{tpu_custom_call.1} parent=1 // pred_region
      %s20 = ssub.s32 256, 256
      %21 = vsyncadd [#allocation3], %s20
      %s22 = sshll.u32 [#allocation2], 4
      %s23 = int_to_ptr.vmem [resolvable:$true] %s22
      %28 = dma.hbm_to_vmem [thread:$0]  %s0, 256, %s23, [#allocation3], 128, 128, 8
    $region5: #{tpu_custom_call.1} parent=1 // pred_fallthru
      _
    // Predicated region
    $region6: #{tpu_custom_call.1} parent=1 // pred_check
      _
    $region7: #{tpu_custom_call.1} parent=1 // pred_check_branch
      %30 = sbr.rel (0) target = $region9
    $region8: #{tpu_custom_call.1} parent=1 // pred_region
      %s32 = ssub.s32 1024, 1024
      %33 = vsyncadd [#allocation6], %s32
      %s34 = sshll.u32 [#allocation5], 4
      %s35 = int_to_ptr.vmem [resolvable:$true] %s34
      %40 = dma.hbm_to_vmem [thread:$0]  %s1, 1024, %s35, [#allocation6], 64, 64, 4
    $region9: #{tpu_custom_call.1} parent=1 // pred_fallthru
      _
    // Predicated region
    $region10: #{tpu_custom_call.1} parent=1 // pred_check
      _
    $region11: #{tpu_custom_call.1} parent=1 // pred_check_branch
      %42 = sbr.rel (0) target = $region13
    $region12: #{tpu_custom_call.1} parent=1 // pred_region
      _
    $region13: #{tpu_custom_call.1} parent=1 // pred_fallthru
      _
    // Predicated region
    $region14: #{tpu_custom_call.1} parent=1 // pred_check
      _
    $region15: #{tpu_custom_call.1} parent=1 // pred_check_branch
      %44 = sbr.rel (0) target = $region17
    $region16: #{tpu_custom_call.1} parent=1 // pred_region
      %s46 = ssub.s32 1024, 1024
      %47 = vsyncadd [#allocation6], %s46
      %s48 = sshll.u32 [#allocation7], 4
      %s49 = int_to_ptr.vmem [resolvable:$true] %s48
      %54 = dma.hbm_to_vmem [thread:$0]  %s3, 1024, %s49, [#allocation6], 64, 64, 4
    $region17: #{tpu_custom_call.1} parent=1 // pred_fallthru
      _
    // Predicated region
    $region18: #{tpu_custom_call.1} parent=1 // pred_check
      _
    $region19: #{tpu_custom_call.1} parent=1 // pred_check_branch
      %56 = sbr.rel (0) target = $region21
    $region20: #{tpu_custom_call.1} parent=1 // pred_region
      _
    $region21: #{tpu_custom_call.1} parent=1 // pred_fallthru
      _
    // Predicated region
    $region22: #{tpu_custom_call.1} parent=1 // pred_check
      _
    $region23: #{tpu_custom_call.1} parent=1 // pred_check_branch
      %58 = sbr.rel (0) target = $region25
    $region24: #{tpu_custom_call.1} parent=1 // pred_region
      %s60 = ssub.s32 1024, 1024
      %61 = vsyncadd [#allocation9], %s60
      %s62 = sshll.u32 [#allocation8], 4
      %s63 = int_to_ptr.vmem [resolvable:$true] %s62
      %68 = dma.hbm_to_vmem [thread:$0]  %s5, 1024, %s63, [#allocation9], 64, 64, 4
    $region25: #{tpu_custom_call.1} parent=1 // pred_fallthru
      _
    // Predicated region
    $region26: #{tpu_custom_call.1} parent=1 // pred_check
      _
    $region27: #{tpu_custom_call.1} parent=1 // pred_check_branch
      %70 = sbr.rel (0) target = $region29
    $region28: #{tpu_custom_call.1} parent=1 // pred_region
      _
    $region29: #{tpu_custom_call.1} parent=1 // pred_fallthru
      _
    // Predicated region
    $region30: #{tpu_custom_call.1} parent=1 // pred_check
      _
    $region31: #{tpu_custom_call.1} parent=1 // pred_check_branch
      %72 = sbr.rel (0) target = $region33
    $region32: #{tpu_custom_call.1} parent=1 // pred_region
      _
    $region33: #{tpu_custom_call.1} parent=1 // pred_fallthru
      _
    // Predicated region
    $region34: #{tpu_custom_call.1} parent=1 // pred_check
      _
    $region35: #{tpu_custom_call.1} parent=1 // pred_check_branch
      %74 = sbr.rel (0) target = $region37
    $region36: #{tpu_custom_call.1} parent=1 // pred_region
      %75 = dma.done [#allocation3], 256
    $region37: #{tpu_custom_call.1} parent=1 // pred_fallthru
      _
    // Predicated region
    $region38: #{tpu_custom_call.1} parent=1 // pred_check
      _
    $region39: #{tpu_custom_call.1} parent=1 // pred_check_branch
      %77 = sbr.rel (0) target = $region41
    $region40: #{tpu_custom_call.1} parent=1 // pred_region
      %78 = dma.done [#allocation6], 1024
    $region41: #{tpu_custom_call.1} parent=1 // pred_fallthru
      _
    // Predicated region
    $region42: #{tpu_custom_call.1} parent=1 // pred_check
      _
    $region43: #{tpu_custom_call.1} parent=1 // pred_check_branch
      %80 = sbr.rel (0) target = $region45
    $region44: #{tpu_custom_call.1} parent=1 // pred_region
      %81 = dma.done [#allocation6], 1024
    $region45: #{tpu_custom_call.1} parent=1 // pred_fallthru
      _
    // Predicated region
    $region46: #{tpu_custom_call.1} parent=1 // pred_check
      _
    $region47: #{tpu_custom_call.1} parent=1 // pred_check_branch
      %83 = sbr.rel (0) target = $region49
    $region48: #{tpu_custom_call.1} parent=1 // pred_region
      %84 = dma.done [#allocation9], 1024
    $region49: #{tpu_custom_call.1} parent=1 // pred_fallthru
      _
    %v86 = vld [vmem:[#allocation2] sm:$0xff]
    %v87 = vld [vmem:[#allocation2 + $0x8] sm:$0xff]
    %v88 = vpack.c.bf16 %v87, %v86
    %v89 = vld [vmem:[#allocation5] sm:$0xf]
    %v90 = vld [vmem:[#allocation5 + $0x4] sm:$0xf]
    %v91 = vld [vmem:[#allocation5 + $0x8] sm:$0xf]
    %v92 = vld [vmem:[#allocation5 + $0xc] sm:$0xf]
    %v93 = vld [vmem:[#allocation5 + $0x10] sm:$0xf]
    %v94 = vld [vmem:[#allocation5 + $0x14] sm:$0xf]
    %v95 = vld [vmem:[#allocation5 + $0x18] sm:$0xf]
    %v96 = vld [vmem:[#allocation5 + $0x1c] sm:$0xf]
    %v97 = vld [vmem:[#allocation5 + $0x20] sm:$0xf]
    %v98 = vld [vmem:[#allocation5 + $0x24] sm:$0xf]
    %v99 = vld [vmem:[#allocation5 + $0x28] sm:$0xf]
    %v100 = vld [vmem:[#allocation5 + $0x2c] sm:$0xf]
    %v101 = vld [vmem:[#allocation5 + $0x30] sm:$0xf]
    %v102 = vld [vmem:[#allocation5 + $0x34] sm:$0xf]
    %v103 = vld [vmem:[#allocation5 + $0x38] sm:$0xf]
    %v104 = vld [vmem:[#allocation5 + $0x3c] sm:$0xf]
    %v105 = vld [vmem:[%s2] sm:$0x1]
    %v107 = vlaneseq
    %v108 = vshrl.u32 %v107, 7
    %v109 = vsub.s32 0, %v108
    %v110 = vrot.slane %v105, %v109
    %v128 = vunpack.c.l.b16 %v89
    %v129 = vunpack.c.l.b16 %v90
    %v130 = vunpack.c.l.b16 %v91
    %v131 = vunpack.c.l.b16 %v92
    %v132 = vunpack.c.l.b16 %v93
    %v133 = vunpack.c.l.b16 %v94
    %v134 = vunpack.c.l.b16 %v95
    %v135 = vunpack.c.l.b16 %v96
    %v136 = vunpack.c.l.b16 %v97
    %v137 = vunpack.c.l.b16 %v98
    %v138 = vunpack.c.l.b16 %v99
    %v139 = vunpack.c.l.b16 %v100
    %v140 = vunpack.c.l.b16 %v101
    %v141 = vunpack.c.l.b16 %v102
    %v142 = vunpack.c.l.b16 %v103
    %v143 = vunpack.c.l.b16 %v104
    %v144 = vpack.c.b16 %v129, %v128
    %v145 = vpack.c.b16 %v131, %v130
    %v146 = vpack.c.b16 %v133, %v132
    %v147 = vpack.c.b16 %v135, %v134
    %v148 = vpack.c.b16 %v137, %v136
    %v149 = vpack.c.b16 %v139, %v138
    %v150 = vpack.c.b16 %v141, %v140
    %v151 = vpack.c.b16 %v143, %v142
    %160 = vmatprep.subr.bf16.mxu0 0
    %161 = vmatpush1.bf16.msra.mxu0 %v144
    %162 = vmatprep.subr.bf16.mxu0 0
    %163 = vmatpush1.bf16.msra.mxu0 %v145
    %164 = vmatprep.subr.bf16.mxu0 0
    %165 = vmatpush1.bf16.msra.mxu0 %v146
    %166 = vmatprep.subr.bf16.mxu0 0
    %167 = vmatpush1.bf16.msra.mxu0 %v147
    %168 = vmatprep.subr.bf16.mxu0 0
    %169 = vmatpush1.bf16.msra.mxu0 %v148
    %170 = vmatprep.subr.bf16.mxu0 0
    %171 = vmatpush1.bf16.msra.mxu0 %v149
    %172 = vmatprep.subr.bf16.mxu0 0
    %173 = vmatpush1.bf16.msra.mxu0 %v150
    %174 = vmatprep.subr.bf16.mxu0 0
    %175 = vmatpush1.bf16.msra.mxu0 %v151
    %176 = vmatprep.subr.bf16.mxu0 0
    %177 = vmatpush1.bf16.msra.mxu0 0
    %178 = vmatprep.subr.bf16.mxu0 0
    %179 = vmatpush1.bf16.msra.mxu0 0
    %180 = vmatprep.subr.bf16.mxu0 0
    %181 = vmatpush1.bf16.msra.mxu0 0
    %182 = vmatprep.subr.bf16.mxu0 0
    %183 = vmatpush1.bf16.msra.mxu0 0
    %184 = vmatprep.subr.bf16.mxu0 0
    %185 = vmatpush1.bf16.msra.mxu0 0
    %186 = vmatprep.subr.bf16.mxu0 0
    %187 = vmatpush1.bf16.msra.mxu0 0
    %188 = vmatprep.subr.bf16.mxu0 0
    %189 = vmatpush1.bf16.msra.mxu0 0
    %190 = vmatprep.subr.bf16.mxu0 0
    %191 = vmatpush1.bf16.msra.mxu0 0
    %192 = vmatprep.mubr.bf16.mxu0 0
    %193 = vmatmul.mubr.bf16.gmra.mrb[0].mxu0 %v88
    %v194 = vpop.f32.mrb[0].mxu0
    %v195 = vadd.f32 %v110, %v194
    %v196 = vpop.f32.mrb[0].mxu0
    %v197 = vpop.f32.mrb[0].mxu0
    %v198 = vadd.f32 %v110, %v197
    %v199 = vpop.f32.mrb[0].mxu0
    %200 = vdwg.mxu0
    %v201 = vmax.f32 %v195, 0.0
    %v202 = vmax.f32 %v198, 0.0
    %v203 = vpack.c.bf16 %v202, %v201
    %v204 = vld [vmem:[#allocation7] sm:$0xf]
    %v205 = vld [vmem:[#allocation7 + $0x4] sm:$0xf]
    %v206 = vld [vmem:[#allocation7 + $0x8] sm:$0xf]
    %v207 = vld [vmem:[#allocation7 + $0xc] sm:$0xf]
    %v208 = vld [vmem:[#allocation7 + $0x10] sm:$0xf]
    %v209 = vld [vmem:[#allocation7 + $0x14] sm:$0xf]
    %v210 = vld [vmem:[#allocation7 + $0x18] sm:$0xf]
    %v211 = vld [vmem:[#allocation7 + $0x1c] sm:$0xf]
    %v212 = vld [vmem:[#allocation7 + $0x20] sm:$0xf]
    %v213 = vld [vmem:[#allocation7 + $0x24] sm:$0xf]
    %v214 = vld [vmem:[#allocation7 + $0x28] sm:$0xf]
    %v215 = vld [vmem:[#allocation7 + $0x2c] sm:$0xf]
    %v216 = vld [vmem:[#allocation7 + $0x30] sm:$0xf]
    %v217 = vld [vmem:[#allocation7 + $0x34] sm:$0xf]
    %v218 = vld [vmem:[#allocation7 + $0x38] sm:$0xf]
    %v219 = vld [vmem:[#allocation7 + $0x3c] sm:$0xf]
    %v220 = vld [vmem:[%s4] sm:$0x1]
    %v222 = vlaneseq
    %v223 = vshrl.u32 %v222, 7
    %v224 = vsub.s32 0, %v223
    %v225 = vrot.slane %v220, %v224
    %v243 = vunpack.c.l.b16 %v204
    %v244 = vunpack.c.l.b16 %v205
    %v245 = vunpack.c.l.b16 %v206
    %v246 = vunpack.c.l.b16 %v207
    %v247 = vunpack.c.l.b16 %v208
    %v248 = vunpack.c.l.b16 %v209
    %v249 = vunpack.c.l.b16 %v210
    %v250 = vunpack.c.l.b16 %v211
    %v251 = vunpack.c.l.b16 %v212
    %v252 = vunpack.c.l.b16 %v213
    %v253 = vunpack.c.l.b16 %v214
    %v254 = vunpack.c.l.b16 %v215
    %v255 = vunpack.c.l.b16 %v216
    %v256 = vunpack.c.l.b16 %v217
    %v257 = vunpack.c.l.b16 %v218
    %v258 = vunpack.c.l.b16 %v219
    %v259 = vpack.c.b16 %v244, %v243
    %v260 = vpack.c.b16 %v246, %v245
    %v261 = vpack.c.b16 %v248, %v247
    %v262 = vpack.c.b16 %v250, %v249
    %v263 = vpack.c.b16 %v252, %v251
    %v264 = vpack.c.b16 %v254, %v253
    %v265 = vpack.c.b16 %v256, %v255
    %v266 = vpack.c.b16 %v258, %v257
    %275 = vmatprep.subr.bf16.mxu0 0
    %276 = vmatpush1.bf16.msra.mxu0 %v259
    %277 = vmatprep.subr.bf16.mxu0 0
    %278 = vmatpush1.bf16.msra.mxu0 %v260
    %279 = vmatprep.subr.bf16.mxu0 0
    %280 = vmatpush1.bf16.msra.mxu0 %v261
    %281 = vmatprep.subr.bf16.mxu0 0
    %282 = vmatpush1.bf16.msra.mxu0 %v262
    %283 = vmatprep.subr.bf16.mxu0 0
    %284 = vmatpush1.bf16.msra.mxu0 %v263
    %285 = vmatprep.subr.bf16.mxu0 0
    %286 = vmatpush1.bf16.msra.mxu0 %v264
    %287 = vmatprep.subr.bf16.mxu0 0
    %288 = vmatpush1.bf16.msra.mxu0 %v265
    %289 = vmatprep.subr.bf16.mxu0 0
    %290 = vmatpush1.bf16.msra.mxu0 %v266
    %291 = vmatprep.subr.bf16.mxu0 0
    %292 = vmatpush1.bf16.msra.mxu0 0
    %293 = vmatprep.subr.bf16.mxu0 0
    %294 = vmatpush1.bf16.msra.mxu0 0
    %295 = vmatprep.subr.bf16.mxu0 0
    %296 = vmatpush1.bf16.msra.mxu0 0
    %297 = vmatprep.subr.bf16.mxu0 0
    %298 = vmatpush1.bf16.msra.mxu0 0
    %299 = vmatprep.subr.bf16.mxu0 0
    %300 = vmatpush1.bf16.msra.mxu0 0
    %301 = vmatprep.subr.bf16.mxu0 0
    %302 = vmatpush1.bf16.msra.mxu0 0
    %303 = vmatprep.subr.bf16.mxu0 0
    %304 = vmatpush1.bf16.msra.mxu0 0
    %305 = vmatprep.subr.bf16.mxu0 0
    %306 = vmatpush1.bf16.msra.mxu0 0
    %307 = vmatprep.mubr.bf16.mxu0 0
    %308 = vmatmul.mubr.bf16.gmra.mrb[0].mxu0 %v203
    %v309 = vpop.f32.mrb[0].mxu0
    %v310 = vadd.f32 %v225, %v309
    %v311 = vpop.f32.mrb[0].mxu0
    %v312 = vpop.f32.mrb[0].mxu0
    %v313 = vadd.f32 %v225, %v312
    %v314 = vpop.f32.mrb[0].mxu0
    %315 = vdwg.mxu0
    %v316 = vmax.f32 %v310, 0.0
    %v317 = vmax.f32 %v313, 0.0
    %v318 = vpack.c.bf16 %v317, %v316
    %v319 = vld [vmem:[#allocation8] sm:$0xf]
    %v320 = vld [vmem:[#allocation8 + $0x4] sm:$0xf]
    %v321 = vld [vmem:[#allocation8 + $0x8] sm:$0xf]
    %v322 = vld [vmem:[#allocation8 + $0xc] sm:$0xf]
    %v323 = vld [vmem:[#allocation8 + $0x10] sm:$0xf]
    %v324 = vld [vmem:[#allocation8 + $0x14] sm:$0xf]
    %v325 = vld [vmem:[#allocation8 + $0x18] sm:$0xf]
    %v326 = vld [vmem:[#allocation8 + $0x1c] sm:$0xf]
    %v327 = vld [vmem:[#allocation8 + $0x20] sm:$0xf]
    %v328 = vld [vmem:[#allocation8 + $0x24] sm:$0xf]
    %v329 = vld [vmem:[#allocation8 + $0x28] sm:$0xf]
    %v330 = vld [vmem:[#allocation8 + $0x2c] sm:$0xf]
    %v331 = vld [vmem:[#allocation8 + $0x30] sm:$0xf]
    %v332 = vld [vmem:[#allocation8 + $0x34] sm:$0xf]
    %v333 = vld [vmem:[#allocation8 + $0x38] sm:$0xf]
    %v334 = vld [vmem:[#allocation8 + $0x3c] sm:$0xf]
    %v335 = vld [vmem:[%s6] sm:$0x1]
    %v337 = vlaneseq
    %v338 = vshrl.u32 %v337, 7
    %v339 = vsub.s32 0, %v338
    %v340 = vrot.slane %v335, %v339
    %v358 = vunpack.c.l.b16 %v319
    %v359 = vunpack.c.l.b16 %v320
    %v360 = vunpack.c.l.b16 %v321
    %v361 = vunpack.c.l.b16 %v322
    %v362 = vunpack.c.l.b16 %v323
    %v363 = vunpack.c.l.b16 %v324
    %v364 = vunpack.c.l.b16 %v325
    %v365 = vunpack.c.l.b16 %v326
    %v366 = vunpack.c.l.b16 %v327
    %v367 = vunpack.c.l.b16 %v328
    %v368 = vunpack.c.l.b16 %v329
    %v369 = vunpack.c.l.b16 %v330
    %v370 = vunpack.c.l.b16 %v331
    %v371 = vunpack.c.l.b16 %v332
    %v372 = vunpack.c.l.b16 %v333
    %v373 = vunpack.c.l.b16 %v334
    %v374 = vpack.c.b16 %v359, %v358
    %v375 = vpack.c.b16 %v361, %v360
    %v376 = vpack.c.b16 %v363, %v362
    %v377 = vpack.c.b16 %v365, %v364
    %v378 = vpack.c.b16 %v367, %v366
    %v379 = vpack.c.b16 %v369, %v368
    %v380 = vpack.c.b16 %v371, %v370
    %v381 = vpack.c.b16 %v373, %v372
    %390 = vmatprep.subr.bf16.mxu0 0
    %391 = vmatpush1.bf16.msra.mxu0 %v374
    %392 = vmatprep.subr.bf16.mxu0 0
    %393 = vmatpush1.bf16.msra.mxu0 %v375
    %394 = vmatprep.subr.bf16.mxu0 0
    %395 = vmatpush1.bf16.msra.mxu0 %v376
    %396 = vmatprep.subr.bf16.mxu0 0
    %397 = vmatpush1.bf16.msra.mxu0 %v377
    %398 = vmatprep.subr.bf16.mxu0 0
    %399 = vmatpush1.bf16.msra.mxu0 %v378
    %400 = vmatprep.subr.bf16.mxu0 0
    %401 = vmatpush1.bf16.msra.mxu0 %v379
    %402 = vmatprep.subr.bf16.mxu0 0
    %403 = vmatpush1.bf16.msra.mxu0 %v380
    %404 = vmatprep.subr.bf16.mxu0 0
    %405 = vmatpush1.bf16.msra.mxu0 %v381
    %406 = vmatprep.subr.bf16.mxu0 0
    %407 = vmatpush1.bf16.msra.mxu0 0
    %408 = vmatprep.subr.bf16.mxu0 0
    %409 = vmatpush1.bf16.msra.mxu0 0
    %410 = vmatprep.subr.bf16.mxu0 0
    %411 = vmatpush1.bf16.msra.mxu0 0
    %412 = vmatprep.subr.bf16.mxu0 0
    %413 = vmatpush1.bf16.msra.mxu0 0
    %414 = vmatprep.subr.bf16.mxu0 0
    %415 = vmatpush1.bf16.msra.mxu0 0
    %416 = vmatprep.subr.bf16.mxu0 0
    %417 = vmatpush1.bf16.msra.mxu0 0
    %418 = vmatprep.subr.bf16.mxu0 0
    %419 = vmatpush1.bf16.msra.mxu0 0
    %420 = vmatprep.subr.bf16.mxu0 0
    %421 = vmatpush1.bf16.msra.mxu0 0
    %422 = vmatprep.mubr.bf16.mxu0 0
    %423 = vmatmul.mubr.bf16.gmra.mrb[0].mxu0 %v318
    %v424 = vpop.f32.mrb[0].mxu0
    %v425 = vadd.f32 %v340, %v424
    %v426 = vpop.f32.mrb[0].mxu0
    %v427 = vpop.f32.mrb[0].mxu0
    %v428 = vadd.f32 %v340, %v427
    %v429 = vpop.f32.mrb[0].mxu0
    %430 = vdwg.mxu0
    %v431 = vmax.f32 %v425, -20.0
    %v432 = vmax.f32 %v428, -20.0
    %v433 = vmin.f32 %v431, 2.0
    %v434 = vmin.f32 %v432, 2.0
    %v435 = vmul.f32 %v433, 1.442695
    %v436 = vpow.pop %v435
    %v437 = vmul.f32 %v434, 1.442695
    %v438 = vpow.pop %v437
    %v439 = vld [vmem:[%s7] sm:$0x1]
    %vm440 = vcmp.ne.f32.partialorder %v439, 0.0
    %v441 = vsel %vm440, 1, 0
    %v442 = vlaneseq
    %v443 = vshrl.u32 %v442, 7
    %v444 = vsub.s32 0, %v443
    %v445 = vrot.slane %v441, %v444
    %vm446 = vcmp.eq.s32.totalorder %v445, 1
    %v447 = vsel %vm446, %v436, %v425
    %v448 = vsel %vm446, %v438, %v428
    %449 = vst [vmem:[#allocation10] sm:$0xff] %v447
    %450 = vst [vmem:[#allocation10 + $0x8] sm:$0xff] %v448
    // Predicated region
    $region50: #{tpu_custom_call.1} parent=1 // pred_check
      _
    $region51: #{tpu_custom_call.1} parent=1 // pred_check_branch
      %452 = sbr.rel (0) target = $region53
    $region52: #{tpu_custom_call.1} parent=1 // pred_region
      %s454 = ssub.s32 256, 256
      %455 = vsyncadd [#allocation4], %s454
      %s456 = sshll.u32 [#allocation10], 4
      %s457 = int_to_ptr.vmem [resolvable:$true] %s456
      %462 = dma.vmem_to_hbm [thread:$0]  %s457, 256, %s8, [#allocation4], 128, 128, 8
    $region53: #{tpu_custom_call.1} parent=1 // pred_fallthru
      _
    // Predicated region
    $region54: #{tpu_custom_call.1} parent=1 // pred_check
      _
    $region55: #{tpu_custom_call.1} parent=1 // pred_check_branch
      %464 = sbr.rel (0) target = $region57
    $region56: #{tpu_custom_call.1} parent=1 // pred_region
      %465 = dma.done [#allocation4], 256
    $region57: #{tpu_custom_call.1} parent=1 // pred_fallthru
      _
    %466 = vsyncpa [#allocation3], 1
    %467 = vsyncpa [#allocation6], 1
    %468 = vsyncpa [#allocation9], 1
    %469 = vsyncpa [#allocation4], 1

// kernel: tpu_custom_call.1
$region0: #{tpu_custom_call.1}
  #allocation0 [shape = 'u32[]', space=smem, size = 0x4, offset = 0x4, fixed_abs, tag = 'smem constant byte address 0x4 - core index']
  #allocation1 [shape = 'u32[144,128]{1,0:T(1,128)}', space=vmem, size = 0x12000, scoped, tag = 'internal scratch']
  %s0 = inlined_call_operand.hbm [shape: f32[16,128], index: 0, kind: input, shape index: {}]
  %s1 = inlined_call_operand.hbm [shape: bf16[128,128], index: 1, kind: input, shape index: {}]
  %s2 = inlined_call_operand.vmem [shape: f32[1,128], index: 2, kind: input, shape index: {}]
  %s3 = inlined_call_operand.hbm [shape: bf16[128,128], index: 3, kind: input, shape index: {}]
  %s4 = inlined_call_operand.vmem [shape: f32[1,128], index: 4, kind: input, shape index: {}]
  %s5 = inlined_call_operand.hbm [shape: bf16[128,128], index: 5, kind: input, shape index: {}]
  %s6 = inlined_call_operand.vmem [shape: f32[1,128], index: 6, kind: input, shape index: {}]
  %s7 = inlined_call_operand.vmem [shape: f32[1,128], index: 7, kind: input, shape index: {}]
  %s8 = inlined_call_operand.hbm [shape: f32[16,128], index: 8, kind: output, shape index: {}]
  %s9 = sld [smem:[#allocation0]]
  $region58: #{tpu_custom_call.1} parent=0
    _
  %s11 = ssub.s32 1, %s9
  %s12 = scalar_select 0, %s11, %s9
  $region1: #{tpu_custom_call.1} parent=0
    #allocation2 [shape = 'u8[8192]{0}', space=vmem, size = 0x2000, scoped, tag = 'input window, operand 0, single buffered']
    #allocation3 [shape = 's32[1]{0}', space=sflag, size = 0x4, scoped, tag = 'scoped memory for tpu_custom_call.1']
    #allocation4 [shape = 's32[1]{0}', space=sflag, size = 0x4, scoped, tag = 'scoped memory for tpu_custom_call.1']
    #allocation5 [shape = 'u8[32768]{0}', space=vmem, size = 0x8000, scoped, tag = 'input window, operand 1, single buffered']
    #allocation6 [shape = 's32[1]{0}', space=sflag, size = 0x4, scoped, tag = 'scoped memory for tpu_custom_call.1']
    #allocation7 [shape = 'u8[32768]{0}', space=vmem, size = 0x8000, scoped, tag = 'input window, operand 3, single buffered']
    #allocation8 [shape = 'u8[32768]{0}', space=vmem, size = 0x8000, scoped, tag = 'input window, operand 5, single buffered']
    #allocation9 [shape = 's32[1]{0}', space=sflag, size = 0x4, scoped, tag = 'scoped memory for tpu_custom_call.1']
    #allocation10 [shape = 'u8[8192]{0}', space=vmem, size = 0x2000, scoped, tag = 'output window, operand 0, single buffered']
    %13 = vsyncpa [#allocation3], 0
    %14 = vsyncpa [#allocation6], 0
    %15 = vsyncpa [#allocation9], 0
    %16 = vsyncpa [#allocation4], 0
    // Predicated region
    $region2: #{tpu_custom_call.1} parent=1 // pred_check
      _
    $region3: #{tpu_custom_call.1} parent=1 // pred_check_branch
      %18 = sbr.rel (0) target = $region5
    $region4: #{tpu_custom_call.1} parent=1 // pred_region
      %s20 = ssub.s32 256, 256
      %21 = vsyncadd [#allocation3], %s20
      %s22 = sshll.u32 [#allocation2], 4
      %s23 = int_to_ptr.vmem [resolvable:$true] %s22
      %28 = dma.hbm_to_vmem [thread:$0]  %s0, 256, %s23, [#allocation3], 128, 128, 8
    $region5: #{tpu_custom_call.1} parent=1 // pred_fallthru
      _
    // Predicated region
    $region6: #{tpu_custom_call.1} parent=1 // pred_check
      _
    $region7: #{tpu_custom_call.1} parent=1 // pred_check_branch
      %30 = sbr.rel (0) target = $region9
    $region8: #{tpu_custom_call.1} parent=1 // pred_region
      %s32 = ssub.s32 1024, 1024
      %33 = vsyncadd [#allocation6], %s32
      %s34 = sshll.u32 [#allocation5], 4
      %s35 = int_to_ptr.vmem [resolvable:$true] %s34
      %40 = dma.hbm_to_vmem [thread:$0]  %s1, 1024, %s35, [#allocation6], 64, 64, 4
    $region9: #{tpu_custom_call.1} parent=1 // pred_fallthru
      _
    // Predicated region
    $region10: #{tpu_custom_call.1} parent=1 // pred_check
      _
    $region11: #{tpu_custom_call.1} parent=1 // pred_check_branch
      %42 = sbr.rel (0) target = $region13
    $region12: #{tpu_custom_call.1} parent=1 // pred_region
      _
    $region13: #{tpu_custom_call.1} parent=1 // pred_fallthru
      _
    // Predicated region
    $region14: #{tpu_custom_call.1} parent=1 // pred_check
      _
    $region15: #{tpu_custom_call.1} parent=1 // pred_check_branch
      %44 = sbr.rel (0) target = $region17
    $region16: #{tpu_custom_call.1} parent=1 // pred_region
      %s46 = ssub.s32 1024, 1024
      %47 = vsyncadd [#allocation6], %s46
      %s48 = sshll.u32 [#allocation7], 4
      %s49 = int_to_ptr.vmem [resolvable:$true] %s48
      %54 = dma.hbm_to_vmem [thread:$0]  %s3, 1024, %s49, [#allocation6], 64, 64, 4
    $region17: #{tpu_custom_call.1} parent=1 // pred_fallthru
      _
    // Predicated region
    $region18: #{tpu_custom_call.1} parent=1 // pred_check
      _
    $region19: #{tpu_custom_call.1} parent=1 // pred_check_branch
      %56 = sbr.rel (0) target = $region21
    $region20: #{tpu_custom_call.1} parent=1 // pred_region
      _
    $region21: #{tpu_custom_call.1} parent=1 // pred_fallthru
      _
    // Predicated region
    $region22: #{tpu_custom_call.1} parent=1 // pred_check
      _
    $region23: #{tpu_custom_call.1} parent=1 // pred_check_branch
      %58 = sbr.rel (0) target = $region25
    $region24: #{tpu_custom_call.1} parent=1 // pred_region
      %s60 = ssub.s32 1024, 1024
      %61 = vsyncadd [#allocation9], %s60
      %s62 = sshll.u32 [#allocation8], 4
      %s63 = int_to_ptr.vmem [resolvable:$true] %s62
      %68 = dma.hbm_to_vmem [thread:$0]  %s5, 1024, %s63, [#allocation9], 64, 64, 4
    $region25: #{tpu_custom_call.1} parent=1 // pred_fallthru
      _
    // Predicated region
    $region26: #{tpu_custom_call.1} parent=1 // pred_check
      _
    $region27: #{tpu_custom_call.1} parent=1 // pred_check_branch
      %70 = sbr.rel (0) target = $region29
    $region28: #{tpu_custom_call.1} parent=1 // pred_region
      _
    $region29: #{tpu_custom_call.1} parent=1 // pred_fallthru
      _
    // Predicated region
    $region30: #{tpu_custom_call.1} parent=1 // pred_check
      _
    $region31: #{tpu_custom_call.1} parent=1 // pred_check_branch
      %72 = sbr.rel (0) target = $region33
    $region32: #{tpu_custom_call.1} parent=1 // pred_region
      _
    $region33: #{tpu_custom_call.1} parent=1 // pred_fallthru
      _
    // Predicated region
    $region34: #{tpu_custom_call.1} parent=1 // pred_check
      _
    $region35: #{tpu_custom_call.1} parent=1 // pred_check_branch
      %74 = sbr.rel (0) target = $region37
    $region36: #{tpu_custom_call.1} parent=1 // pred_region
      %75 = dma.done [#allocation3], 256
    $region37: #{tpu_custom_call.1} parent=1 // pred_fallthru
      _
    // Predicated region
    $region38: #{tpu_custom_call.1} parent=1 // pred_check
      _
    $region39: #{tpu_custom_call.1} parent=1 // pred_check_branch
      %77 = sbr.rel (0) target = $region41
    $region40: #{tpu_custom_call.1} parent=1 // pred_region
      %78 = dma.done [#allocation6], 1024
    $region41: #{tpu_custom_call.1} parent=1 // pred_fallthru
      _
    // Predicated region
    $region42: #{tpu_custom_call.1} parent=1 // pred_check
      _
    $region43: #{tpu_custom_call.1} parent=1 // pred_check_branch
      %80 = sbr.rel (0) target = $region45
    $region44: #{tpu_custom_call.1} parent=1 // pred_region
      %81 = dma.done [#allocation6], 1024
    $region45: #{tpu_custom_call.1} parent=1 // pred_fallthru
      _
    // Predicated region
    $region46: #{tpu_custom_call.1} parent=1 // pred_check
      _
    $region47: #{tpu_custom_call.1} parent=1 // pred_check_branch
      %83 = sbr.rel (0) target = $region49
    $region48: #{tpu_custom_call.1} parent=1 // pred_region
      %84 = dma.done [#allocation9], 1024
    $region49: #{tpu_custom_call.1} parent=1 // pred_fallthru
      _
    %v86 = vld [vmem:[#allocation2] sm:$0xff]
    %v87 = vld [vmem:[#allocation2 + $0x8] sm:$0xff]
    %v88 = vpack.c.bf16 %v87, %v86
    %v89 = vld [vmem:[#allocation5] sm:$0xf]
    %v90 = vld [vmem:[#allocation5 + $0x4] sm:$0xf]
    %v91 = vld [vmem:[#allocation5 + $0x8] sm:$0xf]
    %v92 = vld [vmem:[#allocation5 + $0xc] sm:$0xf]
    %v93 = vld [vmem:[#allocation5 + $0x10] sm:$0xf]
    %v94 = vld [vmem:[#allocation5 + $0x14] sm:$0xf]
    %v95 = vld [vmem:[#allocation5 + $0x18] sm:$0xf]
    %v96 = vld [vmem:[#allocation5 + $0x1c] sm:$0xf]
    %v97 = vld [vmem:[#allocation5 + $0x20] sm:$0xf]
    %v98 = vld [vmem:[#allocation5 + $0x24] sm:$0xf]
    %v99 = vld [vmem:[#allocation5 + $0x28] sm:$0xf]
    %v100 = vld [vmem:[#allocation5 + $0x2c] sm:$0xf]
    %v101 = vld [vmem:[#allocation5 + $0x30] sm:$0xf]
    %v102 = vld [vmem:[#allocation5 + $0x34] sm:$0xf]
    %v103 = vld [vmem:[#allocation5 + $0x38] sm:$0xf]
    %v104 = vld [vmem:[#allocation5 + $0x3c] sm:$0xf]
    %v105 = vld [vmem:[%s2] sm:$0x1]
    %v107 = vlaneseq
    %v108 = vshrl.u32 %v107, 7
    %v109 = vsub.s32 0, %v108
    %v110 = vrot.slane %v105, %v109
    %v128 = vunpack.c.l.b16 %v89
    %v129 = vunpack.c.l.b16 %v90
    %v130 = vunpack.c.l.b16 %v91
    %v131 = vunpack.c.l.b16 %v92
    %v132 = vunpack.c.l.b16 %v93
    %v133 = vunpack.c.l.b16 %v94
    %v134 = vunpack.c.l.b16 %v95
    %v135 = vunpack.c.l.b16 %v96
    %v136 = vunpack.c.l.b16 %v97
    %v137 = vunpack.c.l.b16 %v98
    %v138 = vunpack.c.l.b16 %v99
    %v139 = vunpack.c.l.b16 %v100
    %v140 = vunpack.c.l.b16 %v101
    %v141 = vunpack.c.l.b16 %v102
    %v142 = vunpack.c.l.b16 %v103
    %v143 = vunpack.c.l.b16 %v104
    %v144 = vpack.c.b16 %v129, %v128
    %v145 = vpack.c.b16 %v131, %v130
    %v146 = vpack.c.b16 %v133, %v132
    %v147 = vpack.c.b16 %v135, %v134
    %v148 = vpack.c.b16 %v137, %v136
    %v149 = vpack.c.b16 %v139, %v138
    %v150 = vpack.c.b16 %v141, %v140
    %v151 = vpack.c.b16 %v143, %v142
    %160 = vmatprep.subr.bf16.mxu0 0
    %161 = vmatpush1.bf16.msra.mxu0 %v144
    %162 = vmatprep.subr.bf16.mxu0 0
    %163 = vmatpush1.bf16.msra.mxu0 %v145
    %164 = vmatprep.subr.bf16.mxu0 0
    %165 = vmatpush1.bf16.msra.mxu0 %v146
    %166 = vmatprep.subr.bf16.mxu0 0
    %167 = vmatpush1.bf16.msra.mxu0 %v147
    %168 = vmatprep.subr.bf16.mxu0 0
    %169 = vmatpush1.bf16.msra.mxu0 %v148
    %170 = vmatprep.subr.bf16.mxu0 0
    %171 = vmatpush1.bf16.msra.mxu0 %v149
    %172 = vmatprep.subr.bf16.mxu0 0
    %173 = vmatpush1.bf16.msra.mxu0 %v150
    %174 = vmatprep.subr.bf16.mxu0 0
    %175 = vmatpush1.bf16.msra.mxu0 %v151
    %176 = vmatprep.subr.bf16.mxu0 0
    %177 = vmatpush1.bf16.msra.mxu0 0
    %178 = vmatprep.subr.bf16.mxu0 0
    %179 = vmatpush1.bf16.msra.mxu0 0
    %180 = vmatprep.subr.bf16.mxu0 0
    %181 = vmatpush1.bf16.msra.mxu0 0
    %182 = vmatprep.subr.bf16.mxu0 0
    %183 = vmatpush1.bf16.msra.mxu0 0
    %184 = vmatprep.subr.bf16.mxu0 0
    %185 = vmatpush1.bf16.msra.mxu0 0
    %186 = vmatprep.subr.bf16.mxu0 0
    %187 = vmatpush1.bf16.msra.mxu0 0
    %188 = vmatprep.subr.bf16.mxu0 0
    %189 = vmatpush1.bf16.msra.mxu0 0
    %190 = vmatprep.subr.bf16.mxu0 0
    %191 = vmatpush1.bf16.msra.mxu0 0
    %192 = vmatprep.mubr.bf16.mxu0 0
    %193 = vmatmul.mubr.bf16.gmra.mrb[0].mxu0 %v88
    %v194 = vpop.f32.mrb[0].mxu0
    %v195 = vadd.f32 %v110, %v194
    %v196 = vpop.f32.mrb[0].mxu0
    %v197 = vpop.f32.mrb[0].mxu0
    %v198 = vadd.f32 %v110, %v197
    %v199 = vpop.f32.mrb[0].mxu0
    %200 = vdwg.mxu0
    %v201 = vmax.f32 %v195, 0.0
    %v202 = vmax.f32 %v198, 0.0
    %v203 = vpack.c.bf16 %v202, %v201
    %v204 = vld [vmem:[#allocation7] sm:$0xf]
    %v205 = vld [vmem:[#allocation7 + $0x4] sm:$0xf]
    %v206 = vld [vmem:[#allocation7 + $0x8] sm:$0xf]
    %v207 = vld [vmem:[#allocation7 + $0xc] sm:$0xf]
    %v208 = vld [vmem:[#allocation7 + $0x10] sm:$0xf]
    %v209 = vld [vmem:[#allocation7 + $0x14] sm:$0xf]
    %v210 = vld [vmem:[#allocation7 + $0x18] sm:$0xf]
    %v211 = vld [vmem:[#allocation7 + $0x1c] sm:$0xf]
    %v212 = vld [vmem:[#allocation7 + $0x20] sm:$0xf]
    %v213 = vld [vmem:[#allocation7 + $0x24] sm:$0xf]
    %v214 = vld [vmem:[#allocation7 + $0x28] sm:$0xf]
    %v215 = vld [vmem:[#allocation7 + $0x2c] sm:$0xf]
    %v216 = vld [vmem:[#allocation7 + $0x30] sm:$0xf]
    %v217 = vld [vmem:[#allocation7 + $0x34] sm:$0xf]
    %v218 = vld [vmem:[#allocation7 + $0x38] sm:$0xf]
    %v219 = vld [vmem:[#allocation7 + $0x3c] sm:$0xf]
    %v220 = vld [vmem:[%s4] sm:$0x1]
    %v222 = vlaneseq
    %v223 = vshrl.u32 %v222, 7
    %v224 = vsub.s32 0, %v223
    %v225 = vrot.slane %v220, %v224
    %v243 = vunpack.c.l.b16 %v204
    %v244 = vunpack.c.l.b16 %v205
    %v245 = vunpack.c.l.b16 %v206
    %v246 = vunpack.c.l.b16 %v207
    %v247 = vunpack.c.l.b16 %v208
    %v248 = vunpack.c.l.b16 %v209
    %v249 = vunpack.c.l.b16 %v210
    %v250 = vunpack.c.l.b16 %v211
    %v251 = vunpack.c.l.b16 %v212
    %v252 = vunpack.c.l.b16 %v213
    %v253 = vunpack.c.l.b16 %v214
    %v254 = vunpack.c.l.b16 %v215
    %v255 = vunpack.c.l.b16 %v216
    %v256 = vunpack.c.l.b16 %v217
    %v257 = vunpack.c.l.b16 %v218
    %v258 = vunpack.c.l.b16 %v219
    %v259 = vpack.c.b16 %v244, %v243
    %v260 = vpack.c.b16 %v246, %v245
    %v261 = vpack.c.b16 %v248, %v247
    %v262 = vpack.c.b16 %v250, %v249
    %v263 = vpack.c.b16 %v252, %v251
    %v264 = vpack.c.b16 %v254, %v253
    %v265 = vpack.c.b16 %v256, %v255
    %v266 = vpack.c.b16 %v258, %v257
    %275 = vmatprep.subr.bf16.mxu0 0
    %276 = vmatpush1.bf16.msra.mxu0 %v259
    %277 = vmatprep.subr.bf16.mxu0 0
    %278 = vmatpush1.bf16.msra.mxu0 %v260
    %279 = vmatprep.subr.bf16.mxu0 0
    %280 = vmatpush1.bf16.msra.mxu0 %v261
    %281 = vmatprep.subr.bf16.mxu0 0
    %282 = vmatpush1.bf16.msra.mxu0 %v262
    %283 = vmatprep.subr.bf16.mxu0 0
    %284 = vmatpush1.bf16.msra.mxu0 %v263
    %285 = vmatprep.subr.bf16.mxu0 0
    %286 = vmatpush1.bf16.msra.mxu0 %v264
    %287 = vmatprep.subr.bf16.mxu0 0
    %288 = vmatpush1.bf16.msra.mxu0 %v265
    %289 = vmatprep.subr.bf16.mxu0 0
    %290 = vmatpush1.bf16.msra.mxu0 %v266
    %291 = vmatprep.subr.bf16.mxu0 0
    %292 = vmatpush1.bf16.msra.mxu0 0
    %293 = vmatprep.subr.bf16.mxu0 0
    %294 = vmatpush1.bf16.msra.mxu0 0
    %295 = vmatprep.subr.bf16.mxu0 0
    %296 = vmatpush1.bf16.msra.mxu0 0
    %297 = vmatprep.subr.bf16.mxu0 0
    %298 = vmatpush1.bf16.msra.mxu0 0
    %299 = vmatprep.subr.bf16.mxu0 0
    %300 = vmatpush1.bf16.msra.mxu0 0
    %301 = vmatprep.subr.bf16.mxu0 0
    %302 = vmatpush1.bf16.msra.mxu0 0
    %303 = vmatprep.subr.bf16.mxu0 0
    %304 = vmatpush1.bf16.msra.mxu0 0
    %305 = vmatprep.subr.bf16.mxu0 0
    %306 = vmatpush1.bf16.msra.mxu0 0
    %307 = vmatprep.mubr.bf16.mxu0 0
    %308 = vmatmul.mubr.bf16.gmra.mrb[0].mxu0 %v203
    %v309 = vpop.f32.mrb[0].mxu0
    %v310 = vadd.f32 %v225, %v309
    %v311 = vpop.f32.mrb[0].mxu0
    %v312 = vpop.f32.mrb[0].mxu0
    %v313 = vadd.f32 %v225, %v312
    %v314 = vpop.f32.mrb[0].mxu0
    %315 = vdwg.mxu0
    %v316 = vmax.f32 %v310, 0.0
    %v317 = vmax.f32 %v313, 0.0
    %v318 = vpack.c.bf16 %v317, %v316
    %v319 = vld [vmem:[#allocation8] sm:$0xf]
    %v320 = vld [vmem:[#allocation8 + $0x4] sm:$0xf]
    %v321 = vld [vmem:[#allocation8 + $0x8] sm:$0xf]
    %v322 = vld [vmem:[#allocation8 + $0xc] sm:$0xf]
    %v323 = vld [vmem:[#allocation8 + $0x10] sm:$0xf]
    %v324 = vld [vmem:[#allocation8 + $0x14] sm:$0xf]
    %v325 = vld [vmem:[#allocation8 + $0x18] sm:$0xf]
    %v326 = vld [vmem:[#allocation8 + $0x1c] sm:$0xf]
    %v327 = vld [vmem:[#allocation8 + $0x20] sm:$0xf]
    %v328 = vld [vmem:[#allocation8 + $0x24] sm:$0xf]
    %v329 = vld [vmem:[#allocation8 + $0x28] sm:$0xf]
    %v330 = vld [vmem:[#allocation8 + $0x2c] sm:$0xf]
    %v331 = vld [vmem:[#allocation8 + $0x30] sm:$0xf]
    %v332 = vld [vmem:[#allocation8 + $0x34] sm:$0xf]
    %v333 = vld [vmem:[#allocation8 + $0x38] sm:$0xf]
    %v334 = vld [vmem:[#allocation8 + $0x3c] sm:$0xf]
    %v335 = vld [vmem:[%s6] sm:$0x1]
    %v337 = vlaneseq
    %v338 = vshrl.u32 %v337, 7
    %v339 = vsub.s32 0, %v338
    %v340 = vrot.slane %v335, %v339
    %v358 = vunpack.c.l.b16 %v319
    %v359 = vunpack.c.l.b16 %v320
    %v360 = vunpack.c.l.b16 %v321
    %v361 = vunpack.c.l.b16 %v322
    %v362 = vunpack.c.l.b16 %v323
    %v363 = vunpack.c.l.b16 %v324
    %v364 = vunpack.c.l.b16 %v325
    %v365 = vunpack.c.l.b16 %v326
    %v366 = vunpack.c.l.b16 %v327
    %v367 = vunpack.c.l.b16 %v328
    %v368 = vunpack.c.l.b16 %v329
    %v369 = vunpack.c.l.b16 %v330
    %v370 = vunpack.c.l.b16 %v331
    %v371 = vunpack.c.l.b16 %v332
    %v372 = vunpack.c.l.b16 %v333
    %v373 = vunpack.c.l.b16 %v334
    %v374 = vpack.c.b16 %v359, %v358
    %v375 = vpack.c.b16 %v361, %v360
    %v376 = vpack.c.b16 %v363, %v362
    %v377 = vpack.c.b16 %v365, %v364
    %v378 = vpack.c.b16 %v367, %v366
    %v379 = vpack.c.b16 %v369, %v368
    %v380 = vpack.c.b16 %v371, %v370
    %v381 = vpack.c.b16 %v373, %v372
    %390 = vmatprep.subr.bf16.mxu0 0
    %391 = vmatpush1.bf16.msra.mxu0 %v374
    %392 = vmatprep.subr.bf16.mxu0 0
    %393 = vmatpush1.bf16.msra.mxu0 %v375
    %394 = vmatprep.subr.bf16.mxu0 0
    %395 = vmatpush1.bf16.msra.mxu0 %v376
    %396 = vmatprep.subr.bf16.mxu0 0
    %397 = vmatpush1.bf16.msra.mxu0 %v377
    %398 = vmatprep.subr.bf16.mxu0 0
    %399 = vmatpush1.bf16.msra.mxu0 %v378
    %400 = vmatprep.subr.bf16.mxu0 0
    %401 = vmatpush1.bf16.msra.mxu0 %v379
    %402 = vmatprep.subr.bf16.mxu0 0
    %403 = vmatpush1.bf16.msra.mxu0 %v380
    %404 = vmatprep.subr.bf16.mxu0 0
    %405 = vmatpush1.bf16.msra.mxu0 %v381
    %406 = vmatprep.subr.bf16.mxu0 0
    %407 = vmatpush1.bf16.msra.mxu0 0
    %408 = vmatprep.subr.bf16.mxu0 0
    %409 = vmatpush1.bf16.msra.mxu0 0
    %410 = vmatprep.subr.bf16.mxu0 0
    %411 = vmatpush1.bf16.msra.mxu0 0
    %412 = vmatprep.subr.bf16.mxu0 0
    %413 = vmatpush1.bf16.msra.mxu0 0
    %414 = vmatprep.subr.bf16.mxu0 0
    %415 = vmatpush1.bf16.msra.mxu0 0
    %416 = vmatprep.subr.bf16.mxu0 0
    %417 = vmatpush1.bf16.msra.mxu0 0
    %418 = vmatprep.subr.bf16.mxu0 0
    %419 = vmatpush1.bf16.msra.mxu0 0
    %420 = vmatprep.subr.bf16.mxu0 0
    %421 = vmatpush1.bf16.msra.mxu0 0
    %422 = vmatprep.mubr.bf16.mxu0 0
    %423 = vmatmul.mubr.bf16.gmra.mrb[0].mxu0 %v318
    %v424 = vpop.f32.mrb[0].mxu0
    %v425 = vadd.f32 %v340, %v424
    %v426 = vpop.f32.mrb[0].mxu0
    %v427 = vpop.f32.mrb[0].mxu0
    %v428 = vadd.f32 %v340, %v427
    %v429 = vpop.f32.mrb[0].mxu0
    %430 = vdwg.mxu0
    %v431 = vmax.f32 %v425, -20.0
    %v432 = vmax.f32 %v428, -20.0
    %v433 = vmin.f32 %v431, 2.0
    %v434 = vmin.f32 %v432, 2.0
    %v435 = vmul.f32 %v433, 1.442695
    %v436 = vpow.pop %v435
    %v437 = vmul.f32 %v434, 1.442695
    %v438 = vpow.pop %v437
    %v439 = vld [vmem:[%s7] sm:$0x1]
    %vm440 = vcmp.ne.f32.partialorder %v439, 0.0
    %v441 = vsel %vm440, 1, 0
    %v442 = vlaneseq
    %v443 = vshrl.u32 %v442, 7
    %v444 = vsub.s32 0, %v443
    %v445 = vrot.slane %v441, %v444
    %vm446 = vcmp.eq.s32.totalorder %v445, 1
    %v447 = vsel %vm446, %v436, %v425
    %v448 = vsel %vm446, %v438, %v428
    %449 = vst [vmem:[#allocation10] sm:$0xff] %v447
    %450 = vst [vmem:[#allocation10 + $0x8] sm:$0xff] %v448
    // Predicated region
    $region50: #{tpu_custom_call.1} parent=1 // pred_check
      _
    $region51: #{tpu_custom_call.1} parent=1 // pred_check_branch
      %452 = sbr.rel (0) target = $region53
    $region52: #{tpu_custom_call.1} parent=1 // pred_region
      %s454 = ssub.s32 256, 256
      %455 = vsyncadd [#allocation4], %s454
      %s456 = sshll.u32 [#allocation10], 4
      %s457 = int_to_ptr.vmem [resolvable:$true] %s456
      %462 = dma.vmem_to_hbm [thread:$0]  %s457, 256, %s8, [#allocation4], 128, 128, 8
    $region53: #{tpu_custom_call.1} parent=1 // pred_fallthru
      _
    // Predicated region
    $region54: #{tpu_custom_call.1} parent=1 // pred_check
      _
    $region55: #{tpu_custom_call.1} parent=1 // pred_check_branch
      %464 = sbr.rel (0) target = $region57
    $region56: #{tpu_custom_call.1} parent=1 // pred_region
      %465 = dma.done [#allocation4], 256
    $region57: #{tpu_custom_call.1} parent=1 // pred_fallthru
      _
    %466 = vsyncpa [#allocation3], 1
    %467 = vsyncpa [#allocation6], 1
    %468 = vsyncpa [#allocation9], 1
    %469 = vsyncpa [#allocation4], 1

</llo_original>
